<compile_context>
chip_gen: v7x
topology: tpu7x:2x2x1
jax: 0.10.0
libtpu: 0.0.40
codegen_flags: <defaults>
</compile_context>

<pallas_src>
import functools

import jax
import jax.numpy as jnp
from jax import lax
from jax.experimental import pallas as pl
from jax.experimental.pallas import tpu as pltpu


_NUM_SPLITS = 2  # 2 partial sums: both TensorCores on v7x, harmless on v5e/v6e.


def _pow_const(x, gamma):
    """x ** gamma with a compile-time-constant gamma, EUP/VPU-friendly."""
    g = float(gamma)
    if g == 0.0:
        return jnp.ones_like(x)
    if g.is_integer() and 1 <= int(g) <= 8:
        out = x
        for _ in range(int(g) - 1):
            out = out * x  # VPU multiplies; avoids log/exp on the single EUP slot
        return out
    # Non-integer gamma: exp(g * log(x)). Clamping the base at 1e-30 means a
    # perfectly-classified row yields (1e-30)**gamma instead of exactly 0 --
    # negligible bias; it only avoids -inf * g.
    return jnp.exp(jnp.float32(g) * jnp.log(jnp.maximum(x, jnp.float32(1e-30))))


def _focal_loss_kernel(pred_ref, target_ref, *rest, gamma, use_alpha):
    if use_alpha:
        alpha_ref, out_ref, acc_ref = rest
    else:
        out_ref, acc_ref = rest

    i = pl.program_id(1)

    # Per-row partial-loss accumulator is resident across the reduction axis:
    # zero it on the first inner step, reduce + store only on the last one.
    @pl.when(i == 0)
    def _():
        acc_ref[...] = jnp.zeros_like(acc_ref)

    pred = pred_ref[...].astype(jnp.float32)   # (TILE_N, C), cast in-kernel
    target = target_ref[...]                   # (TILE_N, 1) int32; -1 == padding
    _, c = pred.shape

    # One-hot as a bool mask only (no float materialization): (1, C) class iota
    # broadcast against the (TILE_N, 1) label column.
    col_ids = lax.broadcasted_iota(jnp.int32, (1, c), 1)
    mask = col_ids == target                                 # (TILE_N, C) bool

    # Per-row -log p_t via lane reductions; the full softmax is never formed.
    row_max = jnp.max(pred, axis=1, keepdims=True)           # (TILE_N, 1)
    shifted = pred - row_max
    lse = jnp.log(jnp.sum(jnp.exp(shifted), axis=1, keepdims=True))
    logit_t = jnp.sum(jnp.where(mask, shifted, 0.0), axis=1, keepdims=True)
    nll = lse - logit_t                                      # -log p_t >= 0

    if use_alpha:
        alpha = alpha_ref[...].astype(jnp.float32)           # (1, C)
        alpha_t = jnp.sum(jnp.where(mask, alpha, 0.0), axis=1, keepdims=True)
        p_t = jnp.exp(-nll)
        # 1 - exp(-nll) cancels catastrophically as nll -> 0; switch to a
        # two-term Taylor expansion there (equivalent to -expm1(-nll)).
        one_minus = jnp.where(nll < 1e-3,
                              nll * (1.0 - 0.5 * nll),
                              jnp.maximum(1.0 - p_t, 0.0))
        focus = _pow_const(one_minus, gamma)
        per_row = alpha_t * focus * nll                      # (TILE_N, 1)
    else:
        per_row = nll

    # Select (not multiply): tail rows of the final pred block are unspecified
    # VMEM (pred is streamed unpadded) and could be inf/nan; padded labels are -1.
    per_row = jnp.where(target >= 0, per_row, 0.0)
    acc_ref[...] += per_row

    @pl.when(i == pl.num_programs(1) - 1)
    def _():
        out_ref[...] = jnp.sum(acc_ref[...], axis=0, keepdims=True).reshape(1, 1, 1)


def _vmem_budget():
    """(scoped limit, pipelined-buffer budget) in bytes, per TensorCore."""
    limit = 32 * 1024 * 1024        # safe on every generation incl. v7x (64 MiB/TC)
    pipelined = 24 * 1024 * 1024
    try:
        cap = pltpu.get_tpu_info().vmem_capacity_bytes
        if cap >= 100 * 1024 * 1024:   # v5e / v6e: 128 MiB physical VMEM
            limit = 64 * 1024 * 1024
            pipelined = 56 * 1024 * 1024
    except Exception:
        pass  # unknown / query unavailable -> keep the conservative defaults
    return limit, pipelined


def focal_loss(pred, target, alpha=None, gamma=None):
    """pred: (N, C) logits; target: (N,) int labels; alpha: (C,) or None."""
    n, c = pred.shape
    use_alpha = alpha is not None
    if use_alpha and gamma is None:
        raise ValueError("gamma must be given when alpha is not None")

    itemsize = jnp.dtype(pred.dtype).itemsize
    lanes = -(-c // 128) * 128  # minor dim of a VMEM block pads to 128 lanes
    vmem_limit, pipelined_budget = _vmem_budget()
    # Per-row pipelined footprint: double-buffered pred block (padded lanes) +
    # double-buffered int32 label column (pads to 128 lanes) + single-buffered
    # f32 accumulator scratch (pads to 128 lanes).
    row_bytes = 2 * (lanes * itemsize + 128 * 4) + 128 * 4
    tile_n = max(32, (pipelined_budget // row_bytes) // 32 * 32)  # mult of 32
    tile_n = min(tile_n, -(-n // 32) * 32)

    tiles_total = -(-n // tile_n)
    tiles_per_split = -(-tiles_total // _NUM_SPLITS)
    n_pad = _NUM_SPLITS * tiles_per_split * tile_n

    # Only the tiny label column is padded (label -1 => masked in-kernel); pred
    # is streamed unpadded to avoid a full O(N*C) pad copy for unaligned N.
    target_col = target.astype(jnp.int32).reshape(n, 1)
    if n_pad > n:
        target_in = jnp.pad(target_col, ((0, n_pad - n), (0, 0)), constant_values=-1)
    else:
        target_in = target_col

    last_blk = tiles_total - 1
    # Clamp pred block indices so the round-up tail of the grid never issues a
    # fully out-of-bounds DMA; those steps re-read the last block and are masked.
    pred_map = lambda s, i: (jnp.minimum(s * tiles_per_split + i, last_blk), 0)
    tgt_map = lambda s, i: (s * tiles_per_split + i, 0)

    in_specs = [
        pl.BlockSpec((tile_n, c), pred_map),   # logits tile
        pl.BlockSpec((tile_n, 1), tgt_map),    # labels tile
    ]
    args = [pred, target_in]
    if use_alpha:
        alpha_row = jnp.asarray(alpha, dtype=jnp.float32).reshape(1, c)
        # Constant block index -> Pallas keeps the (1, C) alpha block resident;
        # it is not re-DMA'd every grid step.
        in_specs.append(pl.BlockSpec((1, c), lambda s, i: (0, 0)))
        args.append(alpha_row)

    kernel = functools.partial(
        _focal_loss_kernel,
        gamma=(float(gamma) if use_alpha else 0.0),
        use_alpha=use_alpha,
    )

    partial_sums = pl.pallas_call(
        kernel,
        out_shape=jax.ShapeDtypeStruct((_NUM_SPLITS, 1, 1), jnp.float32),
        grid_spec=pltpu.PrefetchScalarGridSpec(
            num_scalar_prefetch=0,
            grid=(_NUM_SPLITS, tiles_per_split),
            in_specs=in_specs,
            out_specs=pl.BlockSpec((1, 1, 1), lambda s, i: (s, 0, 0)),
            scratch_shapes=[pltpu.VMEM((tile_n, 1), jnp.float32)],
        ),
        compiler_params=pltpu.CompilerParams(
            # TODO(synk): verify in xprof that axis 0 shards across v7x's two
            # TensorCores; if not, switch it to pltpu.CORE_PARALLEL.
            dimension_semantics=("parallel", "arbitrary"),
            vmem_limit_bytes=vmem_limit,
        ),
    )(*args)

    return jnp.sum(partial_sums) / jnp.float32(n)


def _reference_focal_loss(pred, target, alpha=None, gamma=None):
    n, c = pred.shape
    one_hot = jax.nn.one_hot(target, c, dtype=jnp.float32)
    log_pred = -jax.nn.log_softmax(pred.astype(jnp.float32), axis=1)
    if alpha is not None:
        pred_gamma = (1.0 - jax.nn.softmax(pred.astype(jnp.float32), axis=1)) ** gamma
        return jnp.sum(alpha.reshape(1, c) * pred_gamma * (log_pred * one_hot)) / n
    return jnp.sum(log_pred * one_hot) / n


if __name__ == "__main__":
    key = jax.random.PRNGKey(0)
    k1, k2 = jax.random.split(key)

    N, C = 10, 16  # N not a multiple of the tile -> exercises the tail-masking path
    pred = jax.random.normal(k1, (N, C), dtype=jnp.float32)
    target = jax.random.randint(k2, (N,), 0, C, dtype=jnp.int32)
    alpha = jnp.linspace(0.5, 1.5, C, dtype=jnp.float32)

    # alpha + integer gamma (focusing specialised to VPU multiplies)
    loss = jax.block_until_ready(focal_loss(pred, target, alpha=alpha, gamma=2.0))
    ref = jax.block_until_ready(_reference_focal_loss(pred, target, alpha=alpha, gamma=2.0))
    assert jnp.allclose(loss, ref, rtol=1e-5, atol=1e-5), (loss, ref)

    # alpha + non-integer gamma (exp/log focusing path)
    loss15 = jax.block_until_ready(focal_loss(pred, target, alpha=alpha, gamma=1.5))
    ref15 = jax.block_until_ready(_reference_focal_loss(pred, target, alpha=alpha, gamma=1.5))
    assert jnp.allclose(loss15, ref15, rtol=1e-5, atol=1e-5), (loss15, ref15)

    # alpha=None path (plain mean cross-entropy; gamma ignored, as in the PyTorch module)
    loss_na = jax.block_until_ready(focal_loss(pred, target, alpha=None))
    ref_na = jax.block_until_ready(_reference_focal_loss(pred, target, alpha=None))
    assert jnp.allclose(loss_na, ref_na, rtol=1e-5, atol=1e-5), (loss_na, ref_na)

    print("KERNEL_OK")
</pallas_src>

<mosaic_0001>
module attributes {stable_mosaic.version = 11 : i64} {
  func.func @_focal_loss_kernel(%arg0: i32, %arg1: i32, %arg2: memref<32x16xf32, #tpu.memory_space<vmem>>, %arg3: memref<32x1xi32, #tpu.memory_space<vmem>>, %arg4: memref<1x16xf32, #tpu.memory_space<vmem>>, %arg5: memref<1x1x1xf32, #tpu.memory_space<vmem>>, %arg6: memref<32x1xf32, #tpu.memory_space<vmem>>) attributes {dimension_semantics = [#tpu.dimension_semantics<parallel>, #tpu.dimension_semantics<arbitrary>], iteration_bounds = array<i64: 2, 1>, scalar_prefetch = 0 : i64, scratch_operands = 1 : i64, tpu.core_type = #tpu.core_type<tc>, window_params = [{transform_indices = @transform_0, window_bounds = array<i64: 32, 16>}, {transform_indices = @transform_1, window_bounds = array<i64: 32, 1>}, {pipeline_mode = #tpu.pipeline_mode<synchronous>, transform_indices = @transform_2, window_bounds = array<i64: 1, 16>}, {transform_indices = @transform_3, window_bounds = array<i64: 1, 1, 1>}]} {
    %c0_i32 = arith.constant 0 : i32
    %0 = arith.cmpi eq, %arg1, %c0_i32 : i32
    %1 = arith.extui %0 : i1 to i32
    %c0_i32_0 = arith.constant 0 : i32
    %2 = arith.cmpi ne, %1, %c0_i32_0 : i32
    scf.if %2 {
      %cst_25 = arith.constant 0.000000e+00 : f32
      %57 = vector.broadcast %cst_25 : f32 to vector<32x1xf32>
      %c0_26 = arith.constant 0 : index
      %c0_27 = arith.constant 0 : index
      %58 = vector.load %arg6[%c0_26, %c0_27] : memref<32x1xf32, #tpu.memory_space<vmem>>, vector<32x1xf32>
      tpu.vector_store %arg6[%c0_26, %c0_27], %57 {strides = array<i32>} : memref<32x1xf32, #tpu.memory_space<vmem>>, vector<32x1xf32>,
    } else {
    }
    %c0 = arith.constant 0 : index
    %c0_1 = arith.constant 0 : index
    %3 = vector.load %arg2[%c0, %c0_1] : memref<32x16xf32, #tpu.memory_space<vmem>>, vector<32x16xf32>
    %c0_2 = arith.constant 0 : index
    %c0_3 = arith.constant 0 : index
    %4 = vector.load %arg3[%c0_2, %c0_3] : memref<32x1xi32, #tpu.memory_space<vmem>>, vector<32x1xi32>
    %5 = tpu.iota {dimensions = array<i32: 1>} : vector<1x16xi32>
    %6 = vector.broadcast %5 : vector<1x16xi32> to vector<32x16xi32>
    %7 = vector.broadcast %4 : vector<32x1xi32> to vector<32x16xi32>
    %8 = arith.cmpi eq, %6, %7 : vector<32x16xi32>
    %cst = arith.constant dense<0xFF800000> : vector<32xf32>
    %9 = vector.multi_reduction <maximumf>, %3, %cst [1] : vector<32x16xf32> to vector<32xf32>
    %10 = vector.shape_cast %9 : vector<32xf32> to vector<32x1xf32>
    %11 = vector.broadcast %10 : vector<32x1xf32> to vector<32x16xf32>
    %12 = arith.subf %3, %11 : vector<32x16xf32>
    %13 = math.exp %12 : vector<32x16xf32>
    %cst_4 = arith.constant dense<0.000000e+00> : vector<32xf32>
    %14 = vector.multi_reduction <add>, %13, %cst_4 [1] : vector<32x16xf32> to vector<32xf32>
    %15 = vector.shape_cast %14 : vector<32xf32> to vector<32x1xf32>
    %16 = math.log %15 : vector<32x1xf32>
    %cst_5 = arith.constant 0.000000e+00 : f32
    %17 = vector.broadcast %cst_5 : f32 to vector<32x16xf32>
    %18 = arith.select %8, %12, %17 : vector<32x16xi1>, vector<32x16xf32>
    %cst_6 = arith.constant dense<0.000000e+00> : vector<32xf32>
    %19 = vector.multi_reduction <add>, %18, %cst_6 [1] : vector<32x16xf32> to vector<32xf32>
    %20 = vector.shape_cast %19 : vector<32xf32> to vector<32x1xf32>
    %21 = arith.subf %16, %20 : vector<32x1xf32>
    %c0_7 = arith.constant 0 : index
    %c0_8 = arith.constant 0 : index
    %22 = vector.load %arg4[%c0_7, %c0_8] : memref<1x16xf32, #tpu.memory_space<vmem>>, vector<1x16xf32>
    %cst_9 = arith.constant 0.000000e+00 : f32
    %23 = vector.shape_cast %22 : vector<1x16xf32> to vector<1x16xf32>
    %24 = vector.broadcast %23 : vector<1x16xf32> to vector<32x16xf32>
    %25 = vector.broadcast %cst_9 : f32 to vector<32x16xf32>
    %26 = arith.select %8, %24, %25 : vector<32x16xi1>, vector<32x16xf32>
    %cst_10 = arith.constant dense<0.000000e+00> : vector<32xf32>
    %27 = vector.multi_reduction <add>, %26, %cst_10 [1] : vector<32x16xf32> to vector<32xf32>
    %28 = vector.shape_cast %27 : vector<32xf32> to vector<32x1xf32>
    %cst_11 = arith.constant 0.000000e+00 : f32
    %29 = vector.broadcast %cst_11 : f32 to vector<32x1xf32>
    %30 = arith.subf %29, %21 : vector<32x1xf32>
    %31 = math.exp %30 : vector<32x1xf32>
    %cst_12 = arith.constant 1.000000e-03 : f32
    %32 = vector.broadcast %cst_12 : f32 to vector<32x1xf32>
    %33 = arith.cmpf olt, %21, %32 : vector<32x1xf32>
    %cst_13 = arith.constant 5.000000e-01 : f32
    %34 = vector.broadcast %cst_13 : f32 to vector<32x1xf32>
    %35 = arith.mulf %34, %21 : vector<32x1xf32>
    %cst_14 = arith.constant 1.000000e+00 : f32
    %36 = vector.broadcast %cst_14 : f32 to vector<32x1xf32>
    %37 = arith.subf %36, %35 : vector<32x1xf32>
    %38 = arith.mulf %21, %37 : vector<32x1xf32>
    %cst_15 = arith.constant 1.000000e+00 : f32
    %39 = vector.broadcast %cst_15 : f32 to vector<32x1xf32>
    %40 = arith.subf %39, %31 : vector<32x1xf32>
    %cst_16 = arith.constant 0.000000e+00 : f32
    %41 = vector.broadcast %cst_16 : f32 to vector<32x1xf32>
    %42 = arith.maximumf %40, %41 : vector<32x1xf32>
    %43 = arith.select %33, %38, %42 : vector<32x1xi1>, vector<32x1xf32>
    %44 = arith.mulf %43, %43 : vector<32x1xf32>
    %45 = arith.mulf %28, %44 : vector<32x1xf32>
    %46 = arith.mulf %45, %21 : vector<32x1xf32>
    %c0_i32_17 = arith.constant 0 : i32
    %47 = vector.broadcast %c0_i32_17 : i32 to vector<32x1xi32>
    %48 = arith.cmpi sge, %4, %47 : vector<32x1xi32>
    %cst_18 = arith.constant 0.000000e+00 : f32
    %49 = vector.broadcast %cst_18 : f32 to vector<32x1xf32>
    %50 = arith.select %48, %46, %49 : vector<32x1xi1>, vector<32x1xf32>
    %c0_19 = arith.constant 0 : index
    %c0_20 = arith.constant 0 : index
    %51 = vector.load %arg6[%c0_19, %c0_20] : memref<32x1xf32, #tpu.memory_space<vmem>>, vector<32x1xf32>
    %52 = arith.addf %51, %50 : vector<32x1xf32>
    %c0_21 = arith.constant 0 : index
    %c0_22 = arith.constant 0 : index
    %53 = vector.load %arg6[%c0_21, %c0_22] : memref<32x1xf32, #tpu.memory_space<vmem>>, vector<32x1xf32>
    tpu.vector_store %arg6[%c0_21, %c0_22], %52 {strides = array<i32>} : memref<32x1xf32, #tpu.memory_space<vmem>>, vector<32x1xf32>,
    %c0_i32_23 = arith.constant 0 : i32
    %54 = arith.cmpi eq, %arg1, %c0_i32_23 : i32
    %55 = arith.extui %54 : i1 to i32
    %c0_i32_24 = arith.constant 0 : i32
    %56 = arith.cmpi ne, %55, %c0_i32_24 : i32
    scf.if %56 {
      %c0_25 = arith.constant 0 : index
      %c0_26 = arith.constant 0 : index
      %57 = vector.load %arg6[%c0_25, %c0_26] : memref<32x1xf32, #tpu.memory_space<vmem>>, vector<32x1xf32>
      %cst_27 = arith.constant dense<0.000000e+00> : vector<1xf32>
      %58 = vector.multi_reduction <add>, %57, %cst_27 [0] : vector<32x1xf32> to vector<1xf32>
      %59 = vector.shape_cast %58 : vector<1xf32> to vector<1x1xf32>
      %60 = vector.shape_cast %59 : vector<1x1xf32> to vector<1x1x1xf32>
      %c0_28 = arith.constant 0 : index
      %c0_29 = arith.constant 0 : index
      %c0_30 = arith.constant 0 : index
      %61 = vector.load %arg5[%c0_28, %c0_29, %c0_30] : memref<1x1x1xf32, #tpu.memory_space<vmem>>, vector<1x1x1xf32>
      tpu.vector_store %arg5[%c0_28, %c0_29, %c0_30], %60 {strides = array<i32>} : memref<1x1x1xf32, #tpu.memory_space<vmem>>, vector<1x1x1xf32>,
    } else {
    }
    return
  }
  func.func @transform_0(%arg0: i32, %arg1: i32) -> (i32, i32) {
    %c1_i32 = arith.constant 1 : i32
    %0 = arith.muli %arg0, %c1_i32 : i32
    %1 = arith.addi %0, %arg1 : i32
    %c0_i32 = arith.constant 0 : i32
    %2 = arith.minsi %1, %c0_i32 : i32
    %c0_i32_0 = arith.constant 0 : i32
    %c0_i32_1 = arith.constant 0 : i32
    return %2, %c0_i32_0 : i32, i32
  }
  func.func @transform_1(%arg0: i32, %arg1: i32) -> (i32, i32) {
    %c1_i32 = arith.constant 1 : i32
    %0 = arith.muli %arg0, %c1_i32 : i32
    %1 = arith.addi %0, %arg1 : i32
    %c0_i32 = arith.constant 0 : i32
    %c0_i32_0 = arith.constant 0 : i32
    return %1, %c0_i32 : i32, i32
  }
  func.func @transform_2(%arg0: i32, %arg1: i32) -> (i32, i32) {
    %c0_i32 = arith.constant 0 : i32
    %c0_i32_0 = arith.constant 0 : i32
    %c0_i32_1 = arith.constant 0 : i32
    return %c0_i32, %c0_i32_0 : i32, i32
  }
  func.func @transform_3(%arg0: i32, %arg1: i32) -> (i32, i32, i32) {
    %c0_i32 = arith.constant 0 : i32
    %c0_i32_0 = arith.constant 0 : i32
    %c0_i32_1 = arith.constant 0 : i32
    return %arg0, %c0_i32, %c0_i32_0 : i32, i32, i32
  }
}

</mosaic_0001>

<llo_original>
// kernel: tpu_custom_call.1
$region0: #{tpu_custom_call.1}
  #allocation0 [shape = 'u32[]', space=smem, size = 0x4, offset = 0x4, fixed_abs, tag = 'smem constant byte address 0x4 - core index']
  #allocation1 [shape = 'u32[144,128]{1,0:T(1,128)}', space=vmem, size = 0x12000, scoped, tag = 'internal scratch']
  #allocation2 [shape = 'f32[32,1]{1,0:T(8,128)}', space=vmem, size = 0x4000, scoped, tag = 'scratch operand']
  %s0 = inlined_call_operand.vmem [shape: f32[10,16], index: 0, kind: input, shape index: {}]
  %s1 = inlined_call_operand.vmem [shape: s32[64,1], index: 1, kind: input, shape index: {}]
  %s2 = inlined_call_operand.vmem [shape: f32[1,16], index: 2, kind: input, shape index: {}]
  %s3 = inlined_call_operand.vmem [shape: f32[2,1,1], index: 3, kind: output, shape index: {}]
  %s4 = sld [smem:[#allocation0]]
  $region53: #{tpu_custom_call.1} parent=0
    _
  %s6 = ssub.s32 1, %s4
  %s7 = scalar_select 0, %s6, %s4
  loop: start=0, step=1, limit=4
  $region2: #{tpu_custom_call.1} parent=0 // loop_pre_header
    _
  $region3: #{tpu_custom_call.1} parent=0 // loop_header
    %s9 = sphi 0, %s13
    %p10 = scmp.ge.s32.totalorder %s9, 4
    %s16 = sphi 0, %s28
    %s17 = sphi 0, %s24
    %s18 = sphi 0, %s16
    %s19 = sphi 0, %s17
    %s20 = sphi 0, %s18
    %s21 = sphi 0, %s19
    %s37 = sphi 0, %s39
    %s40 = sphi 0, %s37
    %s41 = sphi 0, %s40
    %s57 = sphi 0, %s41
    %s65 = sphi 0, %s67
    %s68 = sphi 0, %s65
    %s69 = sphi 0, %s68
    %s85 = sphi 0, %s69
    %s89 = sphi 0, %s89
    %s91 = sphi 0, %s89
    %s92 = sphi 0, %s91
    %s106 = sphi 0, %s92
    %s112 = sphi 0, %s114
    %s115 = sphi 0, %s112
    %s116 = sphi 0, %s115
    %s132 = sphi 0, %s116
  $region4: #{tpu_custom_call.1} parent=0 // loop_header_branch
    %12 = sbr.rel (%p10) target = $region8
  $region5: #{tpu_custom_call.1} parent=0 // loop_body
    %s14 = ssub.s32 %s9, 1
    %s15 = ssub.s32 %s9, 2
    %s22 = sadd.s32 1, %s17
    %p23 = scmp.ge.s32.totalorder %s22, 1
    %s24 = scalar_select %p23, 0, %s22
    %s25 = sadd.s32 1, %s16
    %s26 = scalar_select %p23, %s25, %s16
    %p27 = scmp.ge.s32.totalorder %s26, 2
    %s28 = scalar_select %p27, 0, %s26
    %s29 = sadd.s32 %s16, %s17
    %p30 = scmp.lt.s32.totalorder %s29, 0
    %s31 = scalar_select %p30, %s29, 0
    %s32 = sadd.s32 %s28, %s24
    %p33 = scmp.lt.s32.totalorder %s32, 0
    %s34 = scalar_select %p33, %s32, 0
    %s35 = ssub.s32 %s31, %s34
    %p36 = scmp.eq.s32.totalorder %s35, 0
    %s38 = sadd.s32 %s37, 1
    %s39 = scalar_select %p36, %s37, %s38
    %p42 = pneg %p36
    %p43 = scmp.eq.s32.totalorder %s9, 1
    %p44 = por %p42, %p43
    %p45 = scmp.ne.s32.totalorder %s37, %s40
    %p46 = scmp.eq.s32.totalorder %s9, 0
    %p47 = por %p45, %p46
    %p48 = scmp.ne.s32.totalorder %s37, %s40
    %p49 = scmp.eq.s32.totalorder %s14, 1
    %p50 = por %p48, %p49
    %p51 = scmp.ne.s32.totalorder %s40, %s41
    %p52 = scmp.eq.s32.totalorder %s14, 0
    %p53 = por %p51, %p52
    %p54 = scmp.ne.s32.totalorder %s40, %s41
    %p55 = scmp.eq.s32.totalorder %s15, 1
    %p56 = por %p54, %p55
    %p58 = scmp.ne.s32.totalorder %s41, %s57
    %p59 = scmp.eq.s32.totalorder %s15, 0
    %p60 = por %p58, %p59
    %s61 = sadd.s32 %s16, %s17
    %s62 = sadd.s32 %s28, %s24
    %s63 = ssub.s32 %s61, %s62
    %p64 = scmp.eq.s32.totalorder %s63, 0
    %s66 = sadd.s32 %s65, 1
    %s67 = scalar_select %p64, %s65, %s66
    %p70 = pneg %p64
    %p71 = scmp.eq.s32.totalorder %s9, 1
    %p72 = por %p70, %p71
    %p73 = scmp.ne.s32.totalorder %s65, %s68
    %p74 = scmp.eq.s32.totalorder %s9, 0
    %p75 = por %p73, %p74
    %p76 = scmp.ne.s32.totalorder %s65, %s68
    %p77 = scmp.eq.s32.totalorder %s14, 1
    %p78 = por %p76, %p77
    %p79 = scmp.ne.s32.totalorder %s68, %s69
    %p80 = scmp.eq.s32.totalorder %s14, 0
    %p81 = por %p79, %p80
    %p82 = scmp.ne.s32.totalorder %s68, %s69
    %p83 = scmp.eq.s32.totalorder %s15, 1
    %p84 = por %p82, %p83
    %p86 = scmp.ne.s32.totalorder %s69, %s85
    %p87 = scmp.eq.s32.totalorder %s15, 0
    %p88 = por %p86, %p87
    %s90 = sadd.s32 %s89, 1
    %p93 = scmp.eq.s32.totalorder %s9, 1
    %p94 = scmp.ne.s32.totalorder %s89, %s91
    %p95 = scmp.eq.s32.totalorder %s9, 0
    %p96 = por %p94, %p95
    %p97 = scmp.ne.s32.totalorder %s89, %s91
    %p98 = scmp.eq.s32.totalorder %s14, 1
    %p99 = por %p97, %p98
    %p100 = scmp.ne.s32.totalorder %s91, %s92
    %p101 = scmp.eq.s32.totalorder %s14, 0
    %p102 = por %p100, %p101
    %p103 = scmp.ne.s32.totalorder %s91, %s92
    %p104 = scmp.eq.s32.totalorder %s15, 1
    %p105 = por %p103, %p104
    %p107 = scmp.ne.s32.totalorder %s92, %s106
    %p108 = scmp.eq.s32.totalorder %s15, 0
    %p109 = por %p107, %p108
    %s110 = ssub.s32 %s16, %s28
    %p111 = scmp.eq.s32.totalorder %s110, 0
    %s113 = sadd.s32 %s112, 1
    %s114 = scalar_select %p111, %s112, %s113
    %p117 = pneg %p111
    %p118 = scmp.eq.s32.totalorder %s9, 1
    %p119 = por %p117, %p118
    %p120 = scmp.ne.s32.totalorder %s112, %s115
    %p121 = scmp.eq.s32.totalorder %s9, 0
    %p122 = por %p120, %p121
    %p123 = scmp.ne.s32.totalorder %s112, %s115
    %p124 = scmp.eq.s32.totalorder %s14, 1
    %p125 = por %p123, %p124
    %p126 = scmp.ne.s32.totalorder %s115, %s116
    %p127 = scmp.eq.s32.totalorder %s14, 0
    %p128 = por %p126, %p127
    %p129 = scmp.ne.s32.totalorder %s115, %s116
    %p130 = scmp.eq.s32.totalorder %s15, 1
    %p131 = por %p129, %p130
    %p133 = scmp.ne.s32.totalorder %s116, %s132
    %p134 = scmp.eq.s32.totalorder %s15, 0
    %p135 = por %p133, %p134
    %p136 = scmp.le.s32.totalorder 1, %s9
    %p137 = scmp.lt.s32.totalorder %s9, 3
    %p138 = pnand %p136, %p137
    %p139 = pneg %p138
    // Predicated region
    $region9: #{tpu_custom_call.1} parent=5 // pred_check
      _
    $region10: #{tpu_custom_call.1} parent=5 // pred_check_branch
      %141 = sbr.rel (%p138) target = $region12
    $region11: #{tpu_custom_call.1} parent=5 // pred_region
      %s142 = ssub.s32 %s9, 1
      // Predicated region
      $region13: #{tpu_custom_call.1} parent=11 // pred_check
        %p143 = pneg %p102
      $region14: #{tpu_custom_call.1} parent=11 // pred_check_branch
        %145 = sbr.rel (%p143) target = $region16
      $region15: #{tpu_custom_call.1} parent=11 // pred_region
        _
      $region16: #{tpu_custom_call.1} parent=11 // pred_fallthru
        _
    $region12: #{tpu_custom_call.1} parent=5 // pred_fallthru
      _
    %p146 = scmp.lt.s32.totalorder %s9, 2
    // Predicated region
    $region17: #{tpu_custom_call.1} parent=5 // pred_check
      %p147 = pneg %p146
    $region18: #{tpu_custom_call.1} parent=5 // pred_check_branch
      %149 = sbr.rel (%p147) target = $region20
    $region19: #{tpu_custom_call.1} parent=5 // pred_region
      // Predicated region
      $region21: #{tpu_custom_call.1} parent=19 // pred_check
        %p150 = pneg %p47
      $region22: #{tpu_custom_call.1} parent=19 // pred_check_branch
        %152 = sbr.rel (%p150) target = $region24
      $region23: #{tpu_custom_call.1} parent=19 // pred_region
        %s153 = sadd.s32 %s16, %s17
        %p154 = scmp.lt.s32.totalorder %s153, 0
        %s155 = scalar_select %p154, %s153, 0
        %s156 = smul.u32 4, %s155
        %s157 = ssub.s32 2, %s156
        %s158 = smul.u32 128, %s157
        %p159 = scmp.lt.s32.totalorder %s156, 1
        %s160 = scalar_select %p159, %s156, 1
        %s161 = smul.addr %s160, 8
        %s162 = scalar_lea.vmem %s0, %s161
        %s163 = sadd.s32 %s16, %s17
        %p164 = scmp.lt.s32.totalorder %s163, 0
        %s165 = scalar_select %p164, %s163, 0
        %s166 = smul.u32 4, %s165
        %s167 = ssub.s32 2, %s166
        %s168 = smul.u32 128, %s167
      $region24: #{tpu_custom_call.1} parent=19 // pred_fallthru
        _
      // Predicated region
      $region25: #{tpu_custom_call.1} parent=19 // pred_check
        %p169 = pneg %p75
      $region26: #{tpu_custom_call.1} parent=19 // pred_check_branch
        %171 = sbr.rel (%p169) target = $region28
      $region27: #{tpu_custom_call.1} parent=19 // pred_region
        %s172 = sadd.s32 %s16, %s17
        %s173 = smul.u32 4, %s172
        %p174 = scmp.lt.s32.totalorder %s173, 7
        %s175 = scalar_select %p174, %s173, 7
        %s176 = smul.addr %s175, 8
        %s177 = scalar_lea.vmem %s1, %s176
        %s178 = sadd.s32 %s16, %s17
        %s179 = smul.u32 4, %s178
      $region28: #{tpu_custom_call.1} parent=19 // pred_fallthru
        _
    $region20: #{tpu_custom_call.1} parent=5 // pred_fallthru
      _
    %p180 = scmp.le.s32.totalorder 1, %s9
    %p181 = scmp.lt.s32.totalorder %s9, 3
    %p182 = pnand %p180, %p181
    %p183 = pneg %p182
    // Predicated region
    $region29: #{tpu_custom_call.1} parent=5 // pred_check
      _
    $region30: #{tpu_custom_call.1} parent=5 // pred_check_branch
      %185 = sbr.rel (%p182) target = $region32
    $region31: #{tpu_custom_call.1} parent=5 // pred_region
      %s186 = ssub.s32 %s9, 1
      %s187 = sadd.s32 %s18, %s19
      %p188 = scmp.lt.s32.totalorder %s187, 0
      %s189 = scalar_select %p188, %s187, 0
      %s190 = smul.u32 4, %s189
      %s191 = ssub.s32 2, %s190
      %s192 = smul.u32 128, %s191
      %p193 = scmp.lt.s32.totalorder %s190, 1
      %s194 = scalar_select %p193, %s190, 1
      %s195 = smul.addr %s194, 8
      %s196 = scalar_lea.vmem %s0, %s195
      %p197 = pneg %p53
      %p198 = pneg %p50
      %s199 = sadd.s32 %s18, %s19
      %s200 = smul.u32 4, %s199
      %p201 = scmp.lt.s32.totalorder %s200, 7
      %s202 = scalar_select %p201, %s200, 7
      %s203 = smul.addr %s202, 8
      %s204 = scalar_lea.vmem %s1, %s203
      %p205 = pneg %p81
      %p206 = pneg %p78
      %p207 = pneg %p102
      %p208 = pneg %p99
      %p209 = pneg %p128
      %p210 = pneg %p125
      %p211 = scmp.lt.s32.totalorder %s18, 1
      %s212 = scalar_select %p211, %s18, 1
      %s213 = scalar_lea.vmem %s3, %s212
      %s214 = sadd.s32 %s18, %s19
      %p215 = scmp.lt.s32.totalorder %s214, 0
      %s216 = scalar_select %p215, %s214, 0
      %s217 = smul.u32 4, %s216
      %s218 = ssub.s32 2, %s217
      %s219 = smul.u32 128, %s218
      %p220 = scmp.lt.s32.totalorder %s217, 1
      %s221 = scalar_select %p220, %s217, 1
      %s222 = smul.addr %s221, 8
      %s223 = scalar_lea.vmem %s0, %s222
      %s224 = sadd.s32 %s18, %s19
      %p225 = scmp.lt.s32.totalorder %s224, 0
      %s226 = scalar_select %p225, %s224, 0
      %s227 = smul.u32 4, %s226
      %s228 = ssub.s32 2, %s227
      %s229 = smul.u32 128, %s228
      %s230 = sadd.s32 %s18, %s19
      %s231 = smul.u32 4, %s230
      %p232 = scmp.lt.s32.totalorder %s231, 7
      %s233 = scalar_select %p232, %s231, 7
      %s234 = smul.addr %s233, 8
      %s235 = scalar_lea.vmem %s1, %s234
      %s236 = sadd.s32 %s18, %s19
      %s237 = smul.u32 4, %s236
      %p238 = scmp.lt.s32.totalorder %s18, 1
      %s239 = scalar_select %p238, %s18, 1
      %s240 = scalar_lea.vmem %s3, %s239
      %p241 = scmp.eq.s32.totalorder %s19, 0
      // Predicated region
      $region33: #{tpu_custom_call.1} parent=31 // pred_check
        %p242 = pneg %p241
      $region34: #{tpu_custom_call.1} parent=31 // pred_check_branch
        %244 = sbr.rel (%p242) target = $region36
      $region35: #{tpu_custom_call.1} parent=31 // pred_region
        %vm245 = vcmask 7168
        %246 = vst.msk [vmem:[#allocation2] sm:$0xff] %vm245, 0.0
        %247 = vst.msk [vmem:[#allocation2 + $0x8] sm:$0xff] %vm245, 0.0
        %248 = vst.msk [vmem:[#allocation2 + $0x10] sm:$0xff] %vm245, 0.0
        %249 = vst.msk [vmem:[#allocation2 + $0x18] sm:$0xff] %vm245, 0.0
      $region36: #{tpu_custom_call.1} parent=31 // pred_fallthru
        _
      %v250 = vld [vmem:[%s223] sm:$0xff]
      %v251 = vld [vmem:[%s223 + $0x8] sm:$0xff]
      %v252 = vld [vmem:[%s223 + $0x10] sm:$0xff]
      %v253 = vld [vmem:[%s223 + $0x18] sm:$0xff]
      %v254 = vld [vmem:[%s235] sm:$0xff]
      %v255 = vld [vmem:[%s235 + $0x8] sm:$0xff]
      %v256 = vld [vmem:[%s235 + $0x10] sm:$0xff]
      %v257 = vld [vmem:[%s235 + $0x18] sm:$0xff]
      %v258 = vlaneseq
      %v259 = vand.u32 %v258, 127
      %260 = vset.pattern.permute.xlu0 0
      %261 = vperm.xlu0 %260, %v254
      %v262 = vpop.permute.xlu0 %261
      %263 = vset.pattern.permute.xlu0 0
      %264 = vperm.xlu0 %263, %v255
      %v265 = vpop.permute.xlu0 %264
      %266 = vset.pattern.permute.xlu0 0
      %267 = vperm.xlu0 %266, %v256
      %v268 = vpop.permute.xlu0 %267
      %269 = vset.pattern.permute.xlu0 0
      %270 = vperm.xlu0 %269, %v257
      %v271 = vpop.permute.xlu0 %270
      %vm272 = vcmp.eq.s32.totalorder %v259, %v262
      %vm273 = vcmp.eq.s32.totalorder %v259, %v265
      %vm274 = vcmp.eq.s32.totalorder %v259, %v268
      %vm275 = vcmp.eq.s32.totalorder %v259, %v271
      %vm276 = vcmask 130048
      %v277 = vsel %vm276, %v250, -inf
      %278 = vmax.xlane.f32.xlu0 %v277
      %v279 = vpop.xlane.xlu0 %278
      %v280 = vsel %vm276, %v251, -inf
      %281 = vmax.xlane.f32.xlu0 %v280
      %v282 = vpop.xlane.xlu0 %281
      %v283 = vsel %vm276, %v252, -inf
      %284 = vmax.xlane.f32.xlu0 %v283
      %v285 = vpop.xlane.xlu0 %284
      %v286 = vsel %vm276, %v253, -inf
      %287 = vmax.xlane.f32.xlu0 %v286
      %v288 = vpop.xlane.xlu0 %287
      %v289 = vsub.f32 %v250, %v279
      %v290 = vsub.f32 %v251, %v282
      %v291 = vsub.f32 %v252, %v285
      %v292 = vsub.f32 %v253, %v288
      %v293 = vmul.f32 %v289, 1.442695
      %v294 = vpow.pop %v293
      %v295 = vmul.f32 %v290, 1.442695
      %v296 = vpow.pop %v295
      %v297 = vmul.f32 %v291, 1.442695
      %v298 = vpow.pop %v297
      %v299 = vmul.f32 %v292, 1.442695
      %v300 = vpow.pop %v299
      %v301 = vsel %vm276, %v294, 0.0
      %302 = vadd.xlane.f32.xlu0 %v301
      %v303 = vpop.xlane.xlu0 %302
      %v304 = vsel %vm276, %v296, 0.0
      %305 = vadd.xlane.f32.xlu0 %v304
      %v306 = vpop.xlane.xlu0 %305
      %v307 = vsel %vm276, %v298, 0.0
      %308 = vadd.xlane.f32.xlu0 %v307
      %v309 = vpop.xlane.xlu0 %308
      %v310 = vsel %vm276, %v300, 0.0
      %311 = vadd.xlane.f32.xlu0 %v310
      %v312 = vpop.xlane.xlu0 %311
      %v313 = vlog2.pop %v303
      %v314 = vmul.f32 %v313, 0.6931472
      %v315 = vlog2.pop %v306
      %v316 = vmul.f32 %v315, 0.6931472
      %v317 = vlog2.pop %v309
      %v318 = vmul.f32 %v317, 0.6931472
      %v319 = vlog2.pop %v312
      %v320 = vmul.f32 %v319, 0.6931472
      %v321 = vsel %vm272, %v289, 0.0
      %v322 = vsel %vm273, %v290, 0.0
      %v323 = vsel %vm274, %v291, 0.0
      %v324 = vsel %vm275, %v292, 0.0
      %v325 = vsel %vm276, %v321, 0.0
      %326 = vadd.xlane.f32.xlu0 %v325
      %v327 = vpop.xlane.xlu0 %326
      %v328 = vsel %vm276, %v322, 0.0
      %329 = vadd.xlane.f32.xlu0 %v328
      %v330 = vpop.xlane.xlu0 %329
      %v331 = vsel %vm276, %v323, 0.0
      %332 = vadd.xlane.f32.xlu0 %v331
      %v333 = vpop.xlane.xlu0 %332
      %v334 = vsel %vm276, %v324, 0.0
      %335 = vadd.xlane.f32.xlu0 %v334
      %v336 = vpop.xlane.xlu0 %335
      %v337 = vsub.f32 %v314, %v327
      %v338 = vsub.f32 %v316, %v330
      %v339 = vsub.f32 %v318, %v333
      %v340 = vsub.f32 %v320, %v336
      %v341 = vld [vmem:[%s2] sm:$0x1]
      %v343 = vlaneseq
      %v344 = vshrl.u32 %v343, 7
      %v345 = vsub.s32 0, %v344
      %v346 = vrot.slane %v341, %v345
      %v348 = vsel %vm272, %v346, 0.0
      %v349 = vsel %vm273, %v346, 0.0
      %v350 = vsel %vm274, %v346, 0.0
      %v351 = vsel %vm275, %v346, 0.0
      %v352 = vsel %vm276, %v348, 0.0
      %353 = vadd.xlane.f32.xlu0 %v352
      %v354 = vpop.xlane.xlu0 %353
      %v355 = vsel %vm276, %v349, 0.0
      %356 = vadd.xlane.f32.xlu0 %v355
      %v357 = vpop.xlane.xlu0 %356
      %v358 = vsel %vm276, %v350, 0.0
      %359 = vadd.xlane.f32.xlu0 %v358
      %v360 = vpop.xlane.xlu0 %359
      %v361 = vsel %vm276, %v351, 0.0
      %362 = vadd.xlane.f32.xlu0 %v361
      %v363 = vpop.xlane.xlu0 %362
      %v364 = vsub.f32 0.0, %v337
      %v365 = vsub.f32 0.0, %v338
      %v366 = vsub.f32 0.0, %v339
      %v367 = vsub.f32 0.0, %v340
      %v368 = vmul.f32 %v364, 1.442695
      %v369 = vpow.pop %v368
      %v370 = vmul.f32 %v365, 1.442695
      %v371 = vpow.pop %v370
      %v372 = vmul.f32 %v366, 1.442695
      %v373 = vpow.pop %v372
      %v374 = vmul.f32 %v367, 1.442695
      %v375 = vpow.pop %v374
      %vm376 = vcmp.lt.f32.partialorder %v337, 0.001
      %vm377 = vcmp.lt.f32.partialorder %v338, 0.001
      %vm378 = vcmp.lt.f32.partialorder %v339, 0.001
      %vm379 = vcmp.lt.f32.partialorder %v340, 0.001
      %v380 = vmul.f32 %v337, 0.5
      %v381 = vmul.f32 %v338, 0.5
      %v382 = vmul.f32 %v339, 0.5
      %v383 = vmul.f32 %v340, 0.5
      %v384 = vsub.f32 1.0, %v380
      %v385 = vsub.f32 1.0, %v381
      %v386 = vsub.f32 1.0, %v382
      %v387 = vsub.f32 1.0, %v383
      %v388 = vmul.f32 %v337, %v384
      %v389 = vmul.f32 %v338, %v385
      %v390 = vmul.f32 %v339, %v386
      %v391 = vmul.f32 %v340, %v387
      %v392 = vsub.f32 1.0, %v369
      %v393 = vsub.f32 1.0, %v371
      %v394 = vsub.f32 1.0, %v373
      %v395 = vsub.f32 1.0, %v375
      %v396 = vmax.f32 %v392, 0.0
      %v397 = vmax.f32 %v393, 0.0
      %v398 = vmax.f32 %v394, 0.0
      %v399 = vmax.f32 %v395, 0.0
      %v400 = vsel %vm376, %v388, %v396
      %v401 = vsel %vm377, %v389, %v397
      %v402 = vsel %vm378, %v390, %v398
      %v403 = vsel %vm379, %v391, %v399
      %v404 = vmul.f32 %v400, %v400
      %v405 = vmul.f32 %v401, %v401
      %v406 = vmul.f32 %v402, %v402
      %v407 = vmul.f32 %v403, %v403
      %v408 = vmul.f32 %v354, %v404
      %v409 = vmul.f32 %v357, %v405
      %v410 = vmul.f32 %v360, %v406
      %v411 = vmul.f32 %v363, %v407
      %v412 = vmul.f32 %v408, %v337
      %v413 = vmul.f32 %v409, %v338
      %v414 = vmul.f32 %v410, %v339
      %v415 = vmul.f32 %v411, %v340
      %vm416 = vcmp.ge.s32.totalorder %v254, 0
      %vm417 = vcmp.ge.s32.totalorder %v255, 0
      %vm418 = vcmp.ge.s32.totalorder %v256, 0
      %vm419 = vcmp.ge.s32.totalorder %v257, 0
      %v420 = vsel %vm416, %v412, 0.0
      %v421 = vsel %vm417, %v413, 0.0
      %v422 = vsel %vm418, %v414, 0.0
      %v423 = vsel %vm419, %v415, 0.0
      %v424 = vld [vmem:[#allocation2] sm:$0xff]
      %v425 = vld [vmem:[#allocation2 + $0x8] sm:$0xff]
      %v426 = vld [vmem:[#allocation2 + $0x10] sm:$0xff]
      %v427 = vld [vmem:[#allocation2 + $0x18] sm:$0xff]
      %v428 = vadd.f32 %v424, %v420
      %v429 = vadd.f32 %v425, %v421
      %v430 = vadd.f32 %v426, %v422
      %v431 = vadd.f32 %v427, %v423
      %vm432 = vcmask 7168
      %433 = vst.msk [vmem:[#allocation2] sm:$0xff] %vm432, %v428
      %434 = vst.msk [vmem:[#allocation2 + $0x8] sm:$0xff] %vm432, %v429
      %435 = vst.msk [vmem:[#allocation2 + $0x10] sm:$0xff] %vm432, %v430
      %436 = vst.msk [vmem:[#allocation2 + $0x18] sm:$0xff] %vm432, %v431
      // Predicated region
      $region37: #{tpu_custom_call.1} parent=31 // pred_check
        %p437 = pneg %p241
      $region38: #{tpu_custom_call.1} parent=31 // pred_check_branch
        %439 = sbr.rel (%p437) target = $region40
      $region39: #{tpu_custom_call.1} parent=31 // pred_region
        %v440 = vld [vmem:[#allocation2] sm:$0xff]
        %v441 = vld [vmem:[#allocation2 + $0x8] sm:$0xff]
        %v442 = vld [vmem:[#allocation2 + $0x10] sm:$0xff]
        %v443 = vld [vmem:[#allocation2 + $0x18] sm:$0xff]
        %v444 = vsel %vm432, %v440, 0.0
        %v445 = vsel %vm432, %v441, 0.0
        %v446 = vadd.f32 %v444, %v445
        %v447 = vsel %vm432, %v442, 0.0
        %v448 = vadd.f32 %v446, %v447
        %v449 = vsel %vm432, %v443, 0.0
        %v450 = vadd.f32 %v448, %v449
        %v451 = vrot.slane %v450, 4
        %v452 = vadd.f32 %v450, %v451
        %v453 = vrot.slane %v452, 2
        %v454 = vadd.f32 %v452, %v453
        %v455 = vrot.slane %v454, 1
        %v456 = vadd.f32 %v454, %v455
        %vm457 = vcmask 0
        %458 = vst.msk [vmem:[%s240] sm:$0x1] %vm457, %v456
      $region40: #{tpu_custom_call.1} parent=31 // pred_fallthru
        _
      %p459 = scmp.lt.s32.totalorder %s18, 1
      %s460 = scalar_select %p459, %s18, 1
      %s461 = scalar_lea.vmem %s3, %s460
      // Predicated region
      $region41: #{tpu_custom_call.1} parent=31 // pred_check
        %p462 = pneg %p125
      $region42: #{tpu_custom_call.1} parent=31 // pred_check_branch
        %464 = sbr.rel (%p462) target = $region44
      $region43: #{tpu_custom_call.1} parent=31 // pred_region
        _
      $region44: #{tpu_custom_call.1} parent=31 // pred_fallthru
        _
    $region32: #{tpu_custom_call.1} parent=5 // pred_fallthru
      _
    %p465 = scmp.le.s32.totalorder 2, %s9
    // Predicated region
    $region45: #{tpu_custom_call.1} parent=5 // pred_check
      %p466 = pneg %p465
    $region46: #{tpu_custom_call.1} parent=5 // pred_check_branch
      %468 = sbr.rel (%p466) target = $region48
    $region47: #{tpu_custom_call.1} parent=5 // pred_region
      %s469 = ssub.s32 %s9, 2
      // Predicated region
      $region49: #{tpu_custom_call.1} parent=47 // pred_check
        %p470 = pneg %p131
      $region50: #{tpu_custom_call.1} parent=47 // pred_check_branch
        %472 = sbr.rel (%p470) target = $region52
      $region51: #{tpu_custom_call.1} parent=47 // pred_region
        %p473 = scmp.lt.s32.totalorder %s20, 1
        %s474 = scalar_select %p473, %s20, 1
        %s475 = scalar_lea.vmem %s3, %s474
      $region52: #{tpu_custom_call.1} parent=47 // pred_fallthru
        _
    $region48: #{tpu_custom_call.1} parent=5 // pred_fallthru
      _
  $region6: #{tpu_custom_call.1} parent=0 // loop_footer
    %s13 = sadd.s32 1, %s9
  $region7: #{tpu_custom_call.1} parent=0 // loop_footer_branch
    %8 = sbr.rel target = $region3
  $region8: #{tpu_custom_call.1} parent=0 // loop_exit
    _

</llo_original>
